<compile_context>
chip_gen: v6e
topology: v6e:2x2x1
jax: 0.10.0
libtpu: 0.0.40
codegen_flags: <defaults>
</compile_context>

<pallas_src>
import jax
import jax.numpy as jnp
from jax.experimental import pallas as pl
from jax.experimental.pallas import tpu as pltpu

IN_DIM = 28 * 28      # 784
HID_DIM = 128
OUT_DIM = 10
SUB = 16              # bf16 sublane-pack-friendly batch granularity


def _round_up(x, m):
    return ((x + m - 1) // m) * m


def mlp_kernel(x_ref, w1_ref, b1_ref, w2_ref, b2_ref, o_ref):
    # fc1: (TB, 784) bf16 @ (784, 128) bf16 -> f32 accumulate on the MXU.
    h = jnp.dot(x_ref[...], w1_ref[...], preferred_element_type=jnp.float32)
    h = h + b1_ref[...]
    # SiLU in f32: h * sigmoid(h)  (logistic/exp goes to the EUP slot).
    h = h * jax.nn.sigmoid(h)
    # fc2: (TB, 128) bf16 @ (128, 10) bf16 -> f32; write the 10-wide block directly.
    y = jnp.dot(h.astype(jnp.bfloat16), w2_ref[...],
                preferred_element_type=jnp.float32)
    o_ref[...] = (y + b2_ref[...]).astype(o_ref.dtype)


def net_forward(x, w1, b1, w2, b2, *, tb=2048):
    """x: (B, 784); w1: (784, 128); b1: (1, 128); w2: (128, 10); b2: (1, 10).

    Returns (B, 10) float32. Weights are (in, out), i.e. transposed vs PyTorch."""
    B = x.shape[0]

    # Pad the batch only to a sublane-friendly multiple (NOT to a multiple of
    # TB); the ragged final grid block is handled by Pallas (masked writes).
    B_pad = _round_up(B, SUB)
    TB = min(tb, B_pad)
    # Give the "parallel" batch axis >= 2 grid steps when possible (v7x megacore).
    if pl.cdiv(B_pad, TB) < 2 and B_pad >= 2 * SUB:
        TB = _round_up(pl.cdiv(B_pad, 2), SUB)
    grid = (pl.cdiv(B_pad, TB),)

    # bf16 on the streamed / matmul operands; biases stay f32 (added to the
    # f32 accumulator). No feature-dim padding of x.
    x_b = x.astype(jnp.bfloat16)
    if B_pad != B:
        x_b = jnp.pad(x_b, ((0, B_pad - B), (0, 0)))
    w1_b = w1.astype(jnp.bfloat16)
    w2_b = w2.astype(jnp.bfloat16)
    b1_f = b1.astype(jnp.float32)
    b2_f = b2.astype(jnp.float32)

    cost = pl.CostEstimate(
        flops=2 * B_pad * (IN_DIM * HID_DIM + HID_DIM * OUT_DIM),
        transcendentals=B_pad * HID_DIM,
        bytes_accessed=(2 * B_pad * IN_DIM        # x (bf16), read once
                        + 2 * IN_DIM * HID_DIM    # W1 (bf16), VMEM-resident
                        + 4 * HID_DIM             # b1 (f32)
                        + 2 * HID_DIM * OUT_DIM   # W2 (bf16)
                        + 4 * OUT_DIM             # b2 (f32)
                        + 4 * B_pad * OUT_DIM),   # out (f32)
    )

    out_padded = pl.pallas_call(
        mlp_kernel,
        out_shape=jax.ShapeDtypeStruct((B_pad, OUT_DIM), jnp.float32),
        grid=grid,
        in_specs=[
            pl.BlockSpec((TB, IN_DIM), lambda i: (i, 0)),        # x tile (streamed)
            pl.BlockSpec((IN_DIM, HID_DIM), lambda i: (0, 0)),   # W1 (resident)
            pl.BlockSpec((1, HID_DIM), lambda i: (0, 0)),        # b1
            pl.BlockSpec((HID_DIM, OUT_DIM), lambda i: (0, 0)),  # W2 (resident)
            pl.BlockSpec((1, OUT_DIM), lambda i: (0, 0)),        # b2
        ],
        out_specs=pl.BlockSpec((TB, OUT_DIM), lambda i: (i, 0)),
        compiler_params=pltpu.CompilerParams(
            dimension_semantics=("parallel",),
        ),
        cost_estimate=cost,
    )(x_b, w1_b, b1_f, w2_b, b2_f)

    # Drop batch padding only (output width is already exactly 10).
    return out_padded[:B] if B_pad != B else out_padded


def init_params(key):
    """Deterministic parameter init (uniform, like PyTorch's default Linear init)."""
    k1, k2, k3, k4 = jax.random.split(key, 4)
    bound1 = 1.0 / (IN_DIM ** 0.5)
    bound2 = 1.0 / (HID_DIM ** 0.5)
    w1 = jax.random.uniform(k1, (IN_DIM, HID_DIM), jnp.float32, -bound1, bound1)
    b1 = jax.random.uniform(k2, (1, HID_DIM), jnp.float32, -bound1, bound1)
    w2 = jax.random.uniform(k3, (HID_DIM, OUT_DIM), jnp.float32, -bound2, bound2)
    b2 = jax.random.uniform(k4, (1, OUT_DIM), jnp.float32, -bound2, bound2)
    return w1, b1, w2, b2


if __name__ == "__main__":
    key = jax.random.PRNGKey(0)
    kx, kp = jax.random.split(key)

    B = 8  # small demo batch
    x = jax.random.normal(kx, (B, IN_DIM), jnp.float32)
    w1, b1, w2, b2 = init_params(kp)

    out = net_forward(x, w1, b1, w2, b2)
    out = jax.block_until_ready(out)
    assert out.shape == (B, OUT_DIM)
    assert out.dtype == jnp.float32

    # Reference with the same bf16 operand casts / f32 accumulation as the kernel.
    xb = x.astype(jnp.bfloat16)
    w1b = w1.astype(jnp.bfloat16)
    w2b = w2.astype(jnp.bfloat16)
    h_ref = jnp.dot(xb, w1b, preferred_element_type=jnp.float32) + b1
    h_ref = h_ref * jax.nn.sigmoid(h_ref)
    ref = jnp.dot(h_ref.astype(jnp.bfloat16), w2b,
                  preferred_element_type=jnp.float32) + b2
    assert jnp.allclose(out, ref, atol=2e-3, rtol=2e-3)

    print("KERNEL_OK")
</pallas_src>

<mosaic_0001>
module attributes {stable_mosaic.version = 11 : i64} {
  func.func @mlp_kernel(%arg0: i32, %arg1: memref<16x784xbf16, #tpu.memory_space<vmem>>, %arg2: memref<784x128xbf16, #tpu.memory_space<vmem>>, %arg3: memref<1x128xf32, #tpu.memory_space<vmem>>, %arg4: memref<128x10xbf16, #tpu.memory_space<vmem>>, %arg5: memref<1x10xf32, #tpu.memory_space<vmem>>, %arg6: memref<16x10xf32, #tpu.memory_space<vmem>>) attributes {dimension_semantics = [#tpu.dimension_semantics<parallel>], iteration_bounds = array<i64: 1>, scalar_prefetch = 0 : i64, scratch_operands = 0 : i64, tpu.core_type = #tpu.core_type<tc>, window_params = [{transform_indices = @transform_0, window_bounds = array<i64: 16, 784>}, {pipeline_mode = #tpu.pipeline_mode<synchronous>, transform_indices = @transform_1, window_bounds = array<i64: 784, 128>}, {pipeline_mode = #tpu.pipeline_mode<synchronous>, transform_indices = @transform_2, window_bounds = array<i64: 1, 128>}, {pipeline_mode = #tpu.pipeline_mode<synchronous>, transform_indices = @transform_3, window_bounds = array<i64: 128, 10>}, {pipeline_mode = #tpu.pipeline_mode<synchronous>, transform_indices = @transform_4, window_bounds = array<i64: 1, 10>}, {transform_indices = @transform_5, window_bounds = array<i64: 16, 10>}]} {
    %c0 = arith.constant 0 : index
    %c0_0 = arith.constant 0 : index
    %0 = vector.load %arg1[%c0, %c0_0] : memref<16x784xbf16, #tpu.memory_space<vmem>>, vector<16x784xbf16>
    %c0_1 = arith.constant 0 : index
    %c0_2 = arith.constant 0 : index
    %1 = vector.load %arg2[%c0_1, %c0_2] : memref<784x128xbf16, #tpu.memory_space<vmem>>, vector<784x128xbf16>
    %cst = arith.constant dense<0.000000e+00> : vector<16x128xf32>
    %2 = tpu.matmul %0, %1, %cst {dimension_numbers = #tpu.dot_dimension_numbers<[1], [0], [0], [1], [0, 0, 1, 1], [], []>} : vector<16x784xbf16>, vector<784x128xbf16>, vector<16x128xf32> -> vector<16x128xf32>
    %c0_3 = arith.constant 0 : index
    %c0_4 = arith.constant 0 : index
    %3 = vector.load %arg3[%c0_3, %c0_4] : memref<1x128xf32, #tpu.memory_space<vmem>>, vector<1x128xf32>
    %4 = vector.broadcast %3 : vector<1x128xf32> to vector<16x128xf32>
    %5 = arith.addf %2, %4 : vector<16x128xf32>
    %6 = arith.negf %5 : vector<16x128xf32>
    %7 = math.exp %6 : vector<16x128xf32>
    %cst_5 = arith.constant 1.000000e+00 : f32
    %8 = vector.broadcast %cst_5 : f32 to vector<16x128xf32>
    %9 = arith.addf %8, %7 : vector<16x128xf32>
    %10 = arith.divf %8, %9 : vector<16x128xf32>
    %11 = arith.mulf %5, %10 : vector<16x128xf32>
    %12 = arith.truncf %11 : vector<16x128xf32> to vector<16x128xbf16>
    %c0_6 = arith.constant 0 : index
    %c0_7 = arith.constant 0 : index
    %13 = vector.load %arg4[%c0_6, %c0_7] : memref<128x10xbf16, #tpu.memory_space<vmem>>, vector<128x10xbf16>
    %cst_8 = arith.constant dense<0.000000e+00> : vector<16x10xf32>
    %14 = tpu.matmul %12, %13, %cst_8 {dimension_numbers = #tpu.dot_dimension_numbers<[1], [0], [0], [1], [0, 0, 1, 1], [], []>} : vector<16x128xbf16>, vector<128x10xbf16>, vector<16x10xf32> -> vector<16x10xf32>
    %c0_9 = arith.constant 0 : index
    %c0_10 = arith.constant 0 : index
    %15 = vector.load %arg5[%c0_9, %c0_10] : memref<1x10xf32, #tpu.memory_space<vmem>>, vector<1x10xf32>
    %16 = vector.broadcast %15 : vector<1x10xf32> to vector<16x10xf32>
    %17 = arith.addf %14, %16 : vector<16x10xf32>
    %c0_11 = arith.constant 0 : index
    %c0_12 = arith.constant 0 : index
    %18 = vector.load %arg6[%c0_11, %c0_12] : memref<16x10xf32, #tpu.memory_space<vmem>>, vector<16x10xf32>
    tpu.vector_store %arg6[%c0_11, %c0_12], %17 {strides = array<i32>} : memref<16x10xf32, #tpu.memory_space<vmem>>, vector<16x10xf32>,
    return
  }
  func.func @transform_0(%arg0: i32) -> (i32, i32) {
    %c0_i32 = arith.constant 0 : i32
    %c0_i32_0 = arith.constant 0 : i32
    return %arg0, %c0_i32 : i32, i32
  }
  func.func @transform_1(%arg0: i32) -> (i32, i32) {
    %c0_i32 = arith.constant 0 : i32
    %c0_i32_0 = arith.constant 0 : i32
    %c0_i32_1 = arith.constant 0 : i32
    return %c0_i32, %c0_i32_0 : i32, i32
  }
  func.func @transform_2(%arg0: i32) -> (i32, i32) {
    %c0_i32 = arith.constant 0 : i32
    %c0_i32_0 = arith.constant 0 : i32
    %c0_i32_1 = arith.constant 0 : i32
    return %c0_i32, %c0_i32_0 : i32, i32
  }
  func.func @transform_3(%arg0: i32) -> (i32, i32) {
    %c0_i32 = arith.constant 0 : i32
    %c0_i32_0 = arith.constant 0 : i32
    %c0_i32_1 = arith.constant 0 : i32
    return %c0_i32, %c0_i32_0 : i32, i32
  }
  func.func @transform_4(%arg0: i32) -> (i32, i32) {
    %c0_i32 = arith.constant 0 : i32
    %c0_i32_0 = arith.constant 0 : i32
    %c0_i32_1 = arith.constant 0 : i32
    return %c0_i32, %c0_i32_0 : i32, i32
  }
  func.func @transform_5(%arg0: i32) -> (i32, i32) {
    %c0_i32 = arith.constant 0 : i32
    %c0_i32_0 = arith.constant 0 : i32
    return %arg0, %c0_i32 : i32, i32
  }
}

</mosaic_0001>

<llo_original>
// kernel: tpu_custom_call.1
$region0: #{tpu_custom_call.1}
  #allocation0 [shape = 'u32[]', space=smem, size = 0x4, offset = 0x4, fixed_abs, tag = 'smem constant byte address 0x4 - core index']
  #allocation1 [shape = 'u32[144,128]{1,0:T(1,128)}', space=vmem, size = 0x12000, scoped, tag = 'internal scratch']
  %s0 = inlined_call_operand.vmem [shape: bf16[16,784], index: 0, kind: input, shape index: {}]
  %s1 = inlined_call_operand.hbm [shape: bf16[784,128], index: 1, kind: input, shape index: {}]
  %s2 = inlined_call_operand.vmem [shape: f32[1,128], index: 2, kind: input, shape index: {}]
  %s3 = inlined_call_operand.vmem [shape: bf16[128,10], index: 3, kind: input, shape index: {}]
  %s4 = inlined_call_operand.vmem [shape: f32[1,10], index: 4, kind: input, shape index: {}]
  %s5 = inlined_call_operand.hbm [shape: f32[16,10], index: 5, kind: output, shape index: {}]
  %s6 = sld [smem:[#allocation0]]
  $region34: #{tpu_custom_call.1} parent=0
    _
  %s8 = ssub.s32 1, %s6
  %s9 = scalar_select 0, %s8, %s6
  $region1: #{tpu_custom_call.1} parent=0
    #allocation2 [shape = 'u8[200704]{0}', space=vmem, size = 0x31000, scoped, tag = 'input window, operand 1, single buffered']
    #allocation3 [shape = 's32[1]{0}', space=sflag, size = 0x4, scoped, tag = 'scoped memory for tpu_custom_call.1']
    #allocation4 [shape = 's32[1]{0}', space=sflag, size = 0x4, scoped, tag = 'scoped memory for tpu_custom_call.1']
    #allocation5 [shape = 'u8[8192]{0}', space=vmem, size = 0x2000, scoped, tag = 'output window, operand 0, single buffered']
    %10 = vsyncpa [#allocation3], 0
    %11 = vsyncpa [#allocation4], 0
    // Predicated region
    $region2: #{tpu_custom_call.1} parent=1 // pred_check
      _
    $region3: #{tpu_custom_call.1} parent=1 // pred_check_branch
      %13 = sbr.rel (0) target = $region5
    $region4: #{tpu_custom_call.1} parent=1 // pred_region
      _
    $region5: #{tpu_custom_call.1} parent=1 // pred_fallthru
      _
    // Predicated region
    $region6: #{tpu_custom_call.1} parent=1 // pred_check
      _
    $region7: #{tpu_custom_call.1} parent=1 // pred_check_branch
      %15 = sbr.rel (0) target = $region9
    $region8: #{tpu_custom_call.1} parent=1 // pred_region
      %s17 = ssub.s32 6272, 6272
      %18 = vsyncadd [#allocation3], %s17
      %s19 = sshll.u32 [#allocation2], 4
      %s20 = int_to_ptr.vmem [resolvable:$true] %s19
      %25 = dma.hbm_to_vmem [thread:$0]  %s1, 6272, %s20, [#allocation3], 64, 64, 4
    $region9: #{tpu_custom_call.1} parent=1 // pred_fallthru
      _
    // Predicated region
    $region10: #{tpu_custom_call.1} parent=1 // pred_check
      _
    $region11: #{tpu_custom_call.1} parent=1 // pred_check_branch
      %27 = sbr.rel (0) target = $region13
    $region12: #{tpu_custom_call.1} parent=1 // pred_region
      _
    $region13: #{tpu_custom_call.1} parent=1 // pred_fallthru
      _
    // Predicated region
    $region14: #{tpu_custom_call.1} parent=1 // pred_check
      _
    $region15: #{tpu_custom_call.1} parent=1 // pred_check_branch
      %29 = sbr.rel (0) target = $region17
    $region16: #{tpu_custom_call.1} parent=1 // pred_region
      _
    $region17: #{tpu_custom_call.1} parent=1 // pred_fallthru
      _
    // Predicated region
    $region18: #{tpu_custom_call.1} parent=1 // pred_check
      _
    $region19: #{tpu_custom_call.1} parent=1 // pred_check_branch
      %31 = sbr.rel (0) target = $region21
    $region20: #{tpu_custom_call.1} parent=1 // pred_region
      _
    $region21: #{tpu_custom_call.1} parent=1 // pred_fallthru
      _
    // Predicated region
    $region22: #{tpu_custom_call.1} parent=1 // pred_check
      _
    $region23: #{tpu_custom_call.1} parent=1 // pred_check_branch
      %33 = sbr.rel (0) target = $region25
    $region24: #{tpu_custom_call.1} parent=1 // pred_region
      %34 = dma.done [#allocation3], 6272
    $region25: #{tpu_custom_call.1} parent=1 // pred_fallthru
      _
    %v36 = vld [vmem:[%s0] sm:$0xff]
    %v37 = vld [vmem:[%s0 + $0x8] sm:$0xff]
    %v38 = vld [vmem:[%s0 + $0x10] sm:$0xff]
    %v39 = vld [vmem:[%s0 + $0x18] sm:$0xf]
    %v40 = vld [vmem:[%s0 + $0x1c] sm:$0xff]
    %v41 = vld [vmem:[%s0 + $0x24] sm:$0xff]
    %v42 = vld [vmem:[%s0 + $0x2c] sm:$0xff]
    %v43 = vld [vmem:[%s0 + $0x34] sm:$0xf]
    %v44 = vld [vmem:[#allocation2] sm:$0xf]
    %v45 = vld [vmem:[#allocation2 + $0x4] sm:$0xf]
    %v46 = vld [vmem:[#allocation2 + $0x8] sm:$0xf]
    %v47 = vld [vmem:[#allocation2 + $0xc] sm:$0xf]
    %v48 = vld [vmem:[#allocation2 + $0x10] sm:$0xf]
    %v49 = vld [vmem:[#allocation2 + $0x14] sm:$0xf]
    %v50 = vld [vmem:[#allocation2 + $0x18] sm:$0xf]
    %v51 = vld [vmem:[#allocation2 + $0x1c] sm:$0xf]
    %v52 = vld [vmem:[#allocation2 + $0x20] sm:$0xf]
    %v53 = vld [vmem:[#allocation2 + $0x24] sm:$0xf]
    %v54 = vld [vmem:[#allocation2 + $0x28] sm:$0xf]
    %v55 = vld [vmem:[#allocation2 + $0x2c] sm:$0xf]
    %v56 = vld [vmem:[#allocation2 + $0x30] sm:$0xf]
    %v57 = vld [vmem:[#allocation2 + $0x34] sm:$0xf]
    %v58 = vld [vmem:[#allocation2 + $0x38] sm:$0xf]
    %v59 = vld [vmem:[#allocation2 + $0x3c] sm:$0xf]
    %v60 = vld [vmem:[#allocation2 + $0x40] sm:$0xf]
    %v61 = vld [vmem:[#allocation2 + $0x44] sm:$0xf]
    %v62 = vld [vmem:[#allocation2 + $0x48] sm:$0xf]
    %v63 = vld [vmem:[#allocation2 + $0x4c] sm:$0xf]
    %v64 = vld [vmem:[#allocation2 + $0x50] sm:$0xf]
    %v65 = vld [vmem:[#allocation2 + $0x54] sm:$0xf]
    %v66 = vld [vmem:[#allocation2 + $0x58] sm:$0xf]
    %v67 = vld [vmem:[#allocation2 + $0x5c] sm:$0xf]
    %v68 = vld [vmem:[#allocation2 + $0x60] sm:$0xf]
    %v69 = vld [vmem:[#allocation2 + $0x64] sm:$0xf]
    %v70 = vld [vmem:[#allocation2 + $0x68] sm:$0xf]
    %v71 = vld [vmem:[#allocation2 + $0x6c] sm:$0xf]
    %v72 = vld [vmem:[#allocation2 + $0x70] sm:$0xf]
    %v73 = vld [vmem:[#allocation2 + $0x74] sm:$0xf]
    %v74 = vld [vmem:[#allocation2 + $0x78] sm:$0xf]
    %v75 = vld [vmem:[#allocation2 + $0x7c] sm:$0xf]
    %v76 = vld [vmem:[#allocation2 + $0x80] sm:$0xf]
    %v77 = vld [vmem:[#allocation2 + $0x84] sm:$0xf]
    %v78 = vld [vmem:[#allocation2 + $0x88] sm:$0xf]
    %v79 = vld [vmem:[#allocation2 + $0x8c] sm:$0xf]
    %v80 = vld [vmem:[#allocation2 + $0x90] sm:$0xf]
    %v81 = vld [vmem:[#allocation2 + $0x94] sm:$0xf]
    %v82 = vld [vmem:[#allocation2 + $0x98] sm:$0xf]
    %v83 = vld [vmem:[#allocation2 + $0x9c] sm:$0xf]
    %v84 = vld [vmem:[#allocation2 + $0xa0] sm:$0xf]
    %v85 = vld [vmem:[#allocation2 + $0xa4] sm:$0xf]
    %v86 = vld [vmem:[#allocation2 + $0xa8] sm:$0xf]
    %v87 = vld [vmem:[#allocation2 + $0xac] sm:$0xf]
    %v88 = vld [vmem:[#allocation2 + $0xb0] sm:$0xf]
    %v89 = vld [vmem:[#allocation2 + $0xb4] sm:$0xf]
    %v90 = vld [vmem:[#allocation2 + $0xb8] sm:$0xf]
    %v91 = vld [vmem:[#allocation2 + $0xbc] sm:$0xf]
    %v92 = vld [vmem:[#allocation2 + $0xc0] sm:$0xf]
    %v93 = vld [vmem:[#allocation2 + $0xc4] sm:$0xf]
    %v94 = vld [vmem:[#allocation2 + $0xc8] sm:$0xf]
    %v95 = vld [vmem:[#allocation2 + $0xcc] sm:$0xf]
    %v96 = vld [vmem:[#allocation2 + $0xd0] sm:$0xf]
    %v97 = vld [vmem:[#allocation2 + $0xd4] sm:$0xf]
    %v98 = vld [vmem:[#allocation2 + $0xd8] sm:$0xf]
    %v99 = vld [vmem:[#allocation2 + $0xdc] sm:$0xf]
    %v100 = vld [vmem:[#allocation2 + $0xe0] sm:$0xf]
    %v101 = vld [vmem:[#allocation2 + $0xe4] sm:$0xf]
    %v102 = vld [vmem:[#allocation2 + $0xe8] sm:$0xf]
    %v103 = vld [vmem:[#allocation2 + $0xec] sm:$0xf]
    %v104 = vld [vmem:[#allocation2 + $0xf0] sm:$0xf]
    %v105 = vld [vmem:[#allocation2 + $0xf4] sm:$0xf]
    %v106 = vld [vmem:[#allocation2 + $0xf8] sm:$0xf]
    %v107 = vld [vmem:[#allocation2 + $0xfc] sm:$0xf]
    %v108 = vld [vmem:[#allocation2 + $0x100] sm:$0xf]
    %v109 = vld [vmem:[#allocation2 + $0x104] sm:$0xf]
    %v110 = vld [vmem:[#allocation2 + $0x108] sm:$0xf]
    %v111 = vld [vmem:[#allocation2 + $0x10c] sm:$0xf]
    %v112 = vld [vmem:[#allocation2 + $0x110] sm:$0xf]
    %v113 = vld [vmem:[#allocation2 + $0x114] sm:$0xf]
    %v114 = vld [vmem:[#allocation2 + $0x118] sm:$0xf]
    %v115 = vld [vmem:[#allocation2 + $0x11c] sm:$0xf]
    %v116 = vld [vmem:[#allocation2 + $0x120] sm:$0xf]
    %v117 = vld [vmem:[#allocation2 + $0x124] sm:$0xf]
    %v118 = vld [vmem:[#allocation2 + $0x128] sm:$0xf]
    %v119 = vld [vmem:[#allocation2 + $0x12c] sm:$0xf]
    %v120 = vld [vmem:[#allocation2 + $0x130] sm:$0xf]
    %v121 = vld [vmem:[#allocation2 + $0x134] sm:$0xf]
    %v122 = vld [vmem:[#allocation2 + $0x138] sm:$0xf]
    %v123 = vld [vmem:[#allocation2 + $0x13c] sm:$0xf]
    %v124 = vld [vmem:[#allocation2 + $0x140] sm:$0xf]
    %v125 = vld [vmem:[#allocation2 + $0x144] sm:$0xf]
    %v126 = vld [vmem:[#allocation2 + $0x148] sm:$0xf]
    %v127 = vld [vmem:[#allocation2 + $0x14c] sm:$0xf]
    %v128 = vld [vmem:[#allocation2 + $0x150] sm:$0xf]
    %v129 = vld [vmem:[#allocation2 + $0x154] sm:$0xf]
    %v130 = vld [vmem:[#allocation2 + $0x158] sm:$0xf]
    %v131 = vld [vmem:[#allocation2 + $0x15c] sm:$0xf]
    %v132 = vld [vmem:[#allocation2 + $0x160] sm:$0xf]
    %v133 = vld [vmem:[#allocation2 + $0x164] sm:$0xf]
    %v134 = vld [vmem:[#allocation2 + $0x168] sm:$0xf]
    %v135 = vld [vmem:[#allocation2 + $0x16c] sm:$0xf]
    %v136 = vld [vmem:[#allocation2 + $0x170] sm:$0xf]
    %v137 = vld [vmem:[#allocation2 + $0x174] sm:$0xf]
    %v138 = vld [vmem:[#allocation2 + $0x178] sm:$0xf]
    %v139 = vld [vmem:[#allocation2 + $0x17c] sm:$0xf]
    %v140 = vld [vmem:[#allocation2 + $0x180] sm:$0xf]
    %v141 = vld [vmem:[#allocation2 + $0x184] sm:$0xf]
    %v142 = vld [vmem:[%s2] sm:$0x1]
    %v144 = vlaneseq
    %v145 = vshrl.u32 %v144, 7
    %v146 = vsub.s32 0, %v145
    %v147 = vrot.slane %v142, %v146
    %v157 = vunpack.c.l.b16 %v36
    %v158 = vunpack.c.h.b16 %v36
    %v159 = vunpack.c.l.b16 %v37
    %v160 = vunpack.c.h.b16 %v37
    %v161 = vunpack.c.l.b16 %v38
    %v162 = vunpack.c.h.b16 %v38
    %v163 = vunpack.c.l.b16 %v39
    %v164 = vunpack.c.l.b16 %v40
    %v165 = vunpack.c.h.b16 %v40
    %v166 = vunpack.c.l.b16 %v41
    %v167 = vunpack.c.h.b16 %v41
    %v168 = vunpack.c.l.b16 %v42
    %v169 = vunpack.c.h.b16 %v42
    %v170 = vunpack.c.l.b16 %v43
    %v171 = vpack.c.b16 %v164, %v157
    %v172 = vpack.c.b16 %v165, %v158
    %v173 = vpack.c.b16 %v166, %v159
    %v174 = vpack.c.b16 %v167, %v160
    %v175 = vpack.c.b16 %v168, %v161
    %v176 = vpack.c.b16 %v169, %v162
    %v177 = vpack.c.b16 %v170, %v163
    %v282 = vunpack.c.l.b16 %v44
    %v283 = vunpack.c.l.b16 %v45
    %v284 = vunpack.c.l.b16 %v46
    %v285 = vunpack.c.l.b16 %v47
    %v286 = vunpack.c.l.b16 %v48
    %v287 = vunpack.c.l.b16 %v49
    %v288 = vunpack.c.l.b16 %v50
    %v289 = vunpack.c.l.b16 %v51
    %v290 = vunpack.c.l.b16 %v52
    %v291 = vunpack.c.l.b16 %v53
    %v292 = vunpack.c.l.b16 %v54
    %v293 = vunpack.c.l.b16 %v55
    %v294 = vunpack.c.l.b16 %v56
    %v295 = vunpack.c.l.b16 %v57
    %v296 = vunpack.c.l.b16 %v58
    %v297 = vunpack.c.l.b16 %v59
    %v298 = vunpack.c.l.b16 %v60
    %v299 = vunpack.c.l.b16 %v61
    %v300 = vunpack.c.l.b16 %v62
    %v301 = vunpack.c.l.b16 %v63
    %v302 = vunpack.c.l.b16 %v64
    %v303 = vunpack.c.l.b16 %v65
    %v304 = vunpack.c.l.b16 %v66
    %v305 = vunpack.c.l.b16 %v67
    %v306 = vunpack.c.l.b16 %v68
    %v307 = vunpack.c.l.b16 %v69
    %v308 = vunpack.c.l.b16 %v70
    %v309 = vunpack.c.l.b16 %v71
    %v310 = vunpack.c.l.b16 %v72
    %v311 = vunpack.c.l.b16 %v73
    %v312 = vunpack.c.l.b16 %v74
    %v313 = vunpack.c.l.b16 %v75
    %v314 = vunpack.c.l.b16 %v76
    %v315 = vunpack.c.l.b16 %v77
    %v316 = vunpack.c.l.b16 %v78
    %v317 = vunpack.c.l.b16 %v79
    %v318 = vunpack.c.l.b16 %v80
    %v319 = vunpack.c.l.b16 %v81
    %v320 = vunpack.c.l.b16 %v82
    %v321 = vunpack.c.l.b16 %v83
    %v322 = vunpack.c.l.b16 %v84
    %v323 = vunpack.c.l.b16 %v85
    %v324 = vunpack.c.l.b16 %v86
    %v325 = vunpack.c.l.b16 %v87
    %v326 = vunpack.c.l.b16 %v88
    %v327 = vunpack.c.l.b16 %v89
    %v328 = vunpack.c.l.b16 %v90
    %v329 = vunpack.c.l.b16 %v91
    %v330 = vunpack.c.l.b16 %v92
    %v331 = vunpack.c.l.b16 %v93
    %v332 = vunpack.c.l.b16 %v94
    %v333 = vunpack.c.l.b16 %v95
    %v334 = vunpack.c.l.b16 %v96
    %v335 = vunpack.c.l.b16 %v97
    %v336 = vunpack.c.l.b16 %v98
    %v337 = vunpack.c.l.b16 %v99
    %v338 = vunpack.c.l.b16 %v100
    %v339 = vunpack.c.l.b16 %v101
    %v340 = vunpack.c.l.b16 %v102
    %v341 = vunpack.c.l.b16 %v103
    %v342 = vunpack.c.l.b16 %v104
    %v343 = vunpack.c.l.b16 %v105
    %v344 = vunpack.c.l.b16 %v106
    %v345 = vunpack.c.l.b16 %v107
    %v346 = vunpack.c.l.b16 %v108
    %v347 = vunpack.c.l.b16 %v109
    %v348 = vunpack.c.l.b16 %v110
    %v349 = vunpack.c.l.b16 %v111
    %v350 = vunpack.c.l.b16 %v112
    %v351 = vunpack.c.l.b16 %v113
    %v352 = vunpack.c.l.b16 %v114
    %v353 = vunpack.c.l.b16 %v115
    %v354 = vunpack.c.l.b16 %v116
    %v355 = vunpack.c.l.b16 %v117
    %v356 = vunpack.c.l.b16 %v118
    %v357 = vunpack.c.l.b16 %v119
    %v358 = vunpack.c.l.b16 %v120
    %v359 = vunpack.c.l.b16 %v121
    %v360 = vunpack.c.l.b16 %v122
    %v361 = vunpack.c.l.b16 %v123
    %v362 = vunpack.c.l.b16 %v124
    %v363 = vunpack.c.l.b16 %v125
    %v364 = vunpack.c.l.b16 %v126
    %v365 = vunpack.c.l.b16 %v127
    %v366 = vunpack.c.l.b16 %v128
    %v367 = vunpack.c.l.b16 %v129
    %v368 = vunpack.c.l.b16 %v130
    %v369 = vunpack.c.l.b16 %v131
    %v370 = vunpack.c.l.b16 %v132
    %v371 = vunpack.c.l.b16 %v133
    %v372 = vunpack.c.l.b16 %v134
    %v373 = vunpack.c.l.b16 %v135
    %v374 = vunpack.c.l.b16 %v136
    %v375 = vunpack.c.l.b16 %v137
    %v376 = vunpack.c.l.b16 %v138
    %v377 = vunpack.c.l.b16 %v139
    %v378 = vunpack.c.l.b16 %v140
    %v379 = vunpack.c.l.b16 %v141
    %v380 = vpack.c.b16 %v283, %v282
    %v381 = vpack.c.b16 %v285, %v284
    %v382 = vpack.c.b16 %v287, %v286
    %v383 = vpack.c.b16 %v289, %v288
    %v384 = vpack.c.b16 %v291, %v290
    %v385 = vpack.c.b16 %v293, %v292
    %v386 = vpack.c.b16 %v295, %v294
    %v387 = vpack.c.b16 %v297, %v296
    %v388 = vpack.c.b16 %v299, %v298
    %v389 = vpack.c.b16 %v301, %v300
    %v390 = vpack.c.b16 %v303, %v302
    %v391 = vpack.c.b16 %v305, %v304
    %v392 = vpack.c.b16 %v307, %v306
    %v393 = vpack.c.b16 %v309, %v308
    %v394 = vpack.c.b16 %v311, %v310
    %v395 = vpack.c.b16 %v313, %v312
    %v396 = vpack.c.b16 %v315, %v314
    %v397 = vpack.c.b16 %v317, %v316
    %v398 = vpack.c.b16 %v319, %v318
    %v399 = vpack.c.b16 %v321, %v320
    %v400 = vpack.c.b16 %v323, %v322
    %v401 = vpack.c.b16 %v325, %v324
    %v402 = vpack.c.b16 %v327, %v326
    %v403 = vpack.c.b16 %v329, %v328
    %v404 = vpack.c.b16 %v331, %v330
    %v405 = vpack.c.b16 %v333, %v332
    %v406 = vpack.c.b16 %v335, %v334
    %v407 = vpack.c.b16 %v337, %v336
    %v408 = vpack.c.b16 %v339, %v338
    %v409 = vpack.c.b16 %v341, %v340
    %v410 = vpack.c.b16 %v343, %v342
    %v411 = vpack.c.b16 %v345, %v344
    %v412 = vpack.c.b16 %v347, %v346
    %v413 = vpack.c.b16 %v349, %v348
    %v414 = vpack.c.b16 %v351, %v350
    %v415 = vpack.c.b16 %v353, %v352
    %v416 = vpack.c.b16 %v355, %v354
    %v417 = vpack.c.b16 %v357, %v356
    %v418 = vpack.c.b16 %v359, %v358
    %v419 = vpack.c.b16 %v361, %v360
    %v420 = vpack.c.b16 %v363, %v362
    %v421 = vpack.c.b16 %v365, %v364
    %v422 = vpack.c.b16 %v367, %v366
    %v423 = vpack.c.b16 %v369, %v368
    %v424 = vpack.c.b16 %v371, %v370
    %v425 = vpack.c.b16 %v373, %v372
    %v426 = vpack.c.b16 %v375, %v374
    %v427 = vpack.c.b16 %v377, %v376
    %v428 = vpack.c.b16 %v379, %v378
    %vm478 = vcmask 130048
    %v480 = vsel %vm478, %v177, 0
    %482 = vmatprep.subr.bf16.mxu0 0
    %483 = vmatpush1.bf16.msra.mxu0 %v387
    %484 = vmatprep.subr.bf16.mxu0 0
    %485 = vmatpush1.bf16.msra.mxu0 %v386
    %486 = vmatprep.subr.bf16.mxu0 0
    %487 = vmatpush1.bf16.msra.mxu0 %v385
    %488 = vmatprep.subr.bf16.mxu0 0
    %489 = vmatpush1.bf16.msra.mxu0 %v384
    %490 = vmatprep.subr.bf16.mxu0 0
    %491 = vmatpush1.bf16.msra.mxu0 %v383
    %492 = vmatprep.subr.bf16.mxu0 0
    %493 = vmatpush1.bf16.msra.mxu0 %v382
    %494 = vmatprep.subr.bf16.mxu0 0
    %495 = vmatpush1.bf16.msra.mxu0 %v381
    %496 = vmatprep.subr.bf16.mxu0 0
    %497 = vmatpush1.bf16.msra.mxu0 %v380
    %498 = vmatprep.subr.bf16.mxu0 0
    %499 = vmatpush2.bf16.msra.mxu0 %v395
    %500 = vmatprep.subr.bf16.mxu0 0
    %501 = vmatpush2.bf16.msra.mxu0 %v394
    %502 = vmatprep.subr.bf16.mxu0 0
    %503 = vmatpush2.bf16.msra.mxu0 %v393
    %504 = vmatprep.subr.bf16.mxu0 0
    %505 = vmatpush2.bf16.msra.mxu0 %v392
    %506 = vmatprep.subr.bf16.mxu0 0
    %507 = vmatpush2.bf16.msra.mxu0 %v391
    %508 = vmatprep.subr.bf16.mxu0 0
    %509 = vmatpush2.bf16.msra.mxu0 %v390
    %510 = vmatprep.subr.bf16.mxu0 0
    %511 = vmatpush2.bf16.msra.mxu0 %v389
    %512 = vmatprep.subr.bf16.mxu0 0
    %513 = vmatpush2.bf16.msra.mxu0 %v388
    %514 = vmatprep.mubr.bf16.mxu0 %v172
    %515 = vmatmul.mubr.bf16.gmra.mxu0 %v171
    %v516 = vpop.f32.mrf.mxu0
    %v517 = vadd.f32 %v147, %v516
    %v518 = vpop.f32.mrf.mxu0
    %v519 = vpop.f32.mrf.mxu0
    %v520 = vadd.f32 %v147, %v519
    %v521 = vpop.f32.mrf.mxu0
    %522 = vdwg.mxu0
    %523 = vmatprep.subr.bf16.mxu0 0
    %524 = vmatpush1.bf16.msra.mxu0 %v403
    %525 = vmatprep.subr.bf16.mxu0 0
    %526 = vmatpush1.bf16.msra.mxu0 %v402
    %527 = vmatprep.subr.bf16.mxu0 0
    %528 = vmatpush1.bf16.msra.mxu0 %v401
    %529 = vmatprep.subr.bf16.mxu0 0
    %530 = vmatpush1.bf16.msra.mxu0 %v400
    %531 = vmatprep.subr.bf16.mxu0 0
    %532 = vmatpush1.bf16.msra.mxu0 %v399
    %533 = vmatprep.subr.bf16.mxu0 0
    %534 = vmatpush1.bf16.msra.mxu0 %v398
    %535 = vmatprep.subr.bf16.mxu0 0
    %536 = vmatpush1.bf16.msra.mxu0 %v397
    %537 = vmatprep.subr.bf16.mxu0 0
    %538 = vmatpush1.bf16.msra.mxu0 %v396
    %539 = vmatprep.subr.bf16.mxu0 0
    %540 = vmatpush2.bf16.msra.mxu0 %v411
    %541 = vmatprep.subr.bf16.mxu0 0
    %542 = vmatpush2.bf16.msra.mxu0 %v410
    %543 = vmatprep.subr.bf16.mxu0 0
    %544 = vmatpush2.bf16.msra.mxu0 %v409
    %545 = vmatprep.subr.bf16.mxu0 0
    %546 = vmatpush2.bf16.msra.mxu0 %v408
    %547 = vmatprep.subr.bf16.mxu0 0
    %548 = vmatpush2.bf16.msra.mxu0 %v407
    %549 = vmatprep.subr.bf16.mxu0 0
    %550 = vmatpush2.bf16.msra.mxu0 %v406
    %551 = vmatprep.subr.bf16.mxu0 0
    %552 = vmatpush2.bf16.msra.mxu0 %v405
    %553 = vmatprep.subr.bf16.mxu0 0
    %554 = vmatpush2.bf16.msra.mxu0 %v404
    %555 = vmatprep.mubr.bf16.mxu0 %v174
    %556 = vmatmul.mubr.bf16.gmra.mxu0 %v173
    %v557 = vpop.f32.mrf.mxu0
    %v558 = vadd.f32 %v517, %v557
    %v559 = vpop.f32.mrf.mxu0
    %v560 = vpop.f32.mrf.mxu0
    %v561 = vadd.f32 %v520, %v560
    %v562 = vpop.f32.mrf.mxu0
    %563 = vdwg.mxu0
    %564 = vmatprep.subr.bf16.mxu0 0
    %565 = vmatpush1.bf16.msra.mxu0 %v419
    %566 = vmatprep.subr.bf16.mxu0 0
    %567 = vmatpush1.bf16.msra.mxu0 %v418
    %568 = vmatprep.subr.bf16.mxu0 0
    %569 = vmatpush1.bf16.msra.mxu0 %v417
    %570 = vmatprep.subr.bf16.mxu0 0
    %571 = vmatpush1.bf16.msra.mxu0 %v416
    %572 = vmatprep.subr.bf16.mxu0 0
    %573 = vmatpush1.bf16.msra.mxu0 %v415
    %574 = vmatprep.subr.bf16.mxu0 0
    %575 = vmatpush1.bf16.msra.mxu0 %v414
    %576 = vmatprep.subr.bf16.mxu0 0
    %577 = vmatpush1.bf16.msra.mxu0 %v413
    %578 = vmatprep.subr.bf16.mxu0 0
    %579 = vmatpush1.bf16.msra.mxu0 %v412
    %580 = vmatprep.subr.bf16.mxu0 0
    %581 = vmatpush2.bf16.msra.mxu0 %v427
    %582 = vmatprep.subr.bf16.mxu0 0
    %583 = vmatpush2.bf16.msra.mxu0 %v426
    %584 = vmatprep.subr.bf16.mxu0 0
    %585 = vmatpush2.bf16.msra.mxu0 %v425
    %586 = vmatprep.subr.bf16.mxu0 0
    %587 = vmatpush2.bf16.msra.mxu0 %v424
    %588 = vmatprep.subr.bf16.mxu0 0
    %589 = vmatpush2.bf16.msra.mxu0 %v423
    %590 = vmatprep.subr.bf16.mxu0 0
    %591 = vmatpush2.bf16.msra.mxu0 %v422
    %592 = vmatprep.subr.bf16.mxu0 0
    %593 = vmatpush2.bf16.msra.mxu0 %v421
    %594 = vmatprep.subr.bf16.mxu0 0
    %595 = vmatpush2.bf16.msra.mxu0 %v420
    %596 = vmatprep.mubr.bf16.mxu0 %v176
    %597 = vmatmul.mubr.bf16.gmra.mxu0 %v175
    %v598 = vpop.f32.mrf.mxu0
    %v599 = vadd.f32 %v558, %v598
    %v600 = vpop.f32.mrf.mxu0
    %v601 = vpop.f32.mrf.mxu0
    %v602 = vadd.f32 %v561, %v601
    %v603 = vpop.f32.mrf.mxu0
    %604 = vdwg.mxu0
    %605 = vmatprep.subr.bf16.mxu0 0
    %606 = vmatpush1.bf16.msra.mxu0 0
    %607 = vmatprep.subr.bf16.mxu0 0
    %608 = vmatpush1.bf16.msra.mxu0 0
    %609 = vmatprep.subr.bf16.mxu0 0
    %610 = vmatpush1.bf16.msra.mxu0 0
    %611 = vmatprep.subr.bf16.mxu0 0
    %612 = vmatpush1.bf16.msra.mxu0 0
    %613 = vmatprep.subr.bf16.mxu0 0
    %614 = vmatpush1.bf16.msra.mxu0 0
    %615 = vmatprep.subr.bf16.mxu0 0
    %616 = vmatpush1.bf16.msra.mxu0 0
    %617 = vmatprep.subr.bf16.mxu0 0
    %618 = vmatpush1.bf16.msra.mxu0 0
    %619 = vmatprep.subr.bf16.mxu0 0
    %620 = vmatpush1.bf16.msra.mxu0 %v428
    %621 = vmatprep.subr.bf16.mxu0 0
    %622 = vmatpush2.bf16.msra.mxu0 0
    %623 = vmatprep.subr.bf16.mxu0 0
    %624 = vmatpush2.bf16.msra.mxu0 0
    %625 = vmatprep.subr.bf16.mxu0 0
    %626 = vmatpush2.bf16.msra.mxu0 0
    %627 = vmatprep.subr.bf16.mxu0 0
    %628 = vmatpush2.bf16.msra.mxu0 0
    %629 = vmatprep.subr.bf16.mxu0 0
    %630 = vmatpush2.bf16.msra.mxu0 0
    %631 = vmatprep.subr.bf16.mxu0 0
    %632 = vmatpush2.bf16.msra.mxu0 0
    %633 = vmatprep.subr.bf16.mxu0 0
    %634 = vmatpush2.bf16.msra.mxu0 0
    %635 = vmatprep.subr.bf16.mxu0 0
    %636 = vmatpush2.bf16.msra.mxu0 0
    %637 = vmatprep.mubr.bf16.mxu0 0
    %638 = vmatmul.mubr.bf16.gmra.mxu0 %v480
    %v639 = vpop.f32.mrf.mxu0
    %v640 = vadd.f32 %v599, %v639
    %v641 = vpop.f32.mrf.mxu0
    %v642 = vpop.f32.mrf.mxu0
    %v643 = vadd.f32 %v602, %v642
    %v644 = vpop.f32.mrf.mxu0
    %645 = vdwg.mxu0
    %v646 = vxor.u32 %v640, 2147483648
    %v647 = vxor.u32 %v643, 2147483648
    %v648 = vmul.f32 %v646, 1.442695
    %v649 = vpow.pop %v648
    %v650 = vmul.f32 %v647, 1.442695
    %v651 = vpow.pop %v650
    %v652 = vadd.f32 %v649, 1.0
    %v653 = vadd.f32 %v651, 1.0
    %v654 = vrcp.pop %v652
    %v655 = vmul.f32 1.0, %v654
    %v656 = vrcp.pop %v653
    %v657 = vmul.f32 1.0, %v656
    %v658 = vmul.f32 %v640, %v655
    %v659 = vmul.f32 %v643, %v657
    %v660 = vpack.c.bf16 %v659, %v658
    %v661 = vld [vmem:[%s3] sm:$0xf]
    %v662 = vld [vmem:[%s3 + $0x4] sm:$0xf]
    %v663 = vld [vmem:[%s3 + $0x8] sm:$0xf]
    %v664 = vld [vmem:[%s3 + $0xc] sm:$0xf]
    %v665 = vld [vmem:[%s3 + $0x10] sm:$0xf]
    %v666 = vld [vmem:[%s3 + $0x14] sm:$0xf]
    %v667 = vld [vmem:[%s3 + $0x18] sm:$0xf]
    %v668 = vld [vmem:[%s3 + $0x1c] sm:$0xf]
    %v669 = vld [vmem:[%s3 + $0x20] sm:$0xf]
    %v670 = vld [vmem:[%s3 + $0x24] sm:$0xf]
    %v671 = vld [vmem:[%s3 + $0x28] sm:$0xf]
    %v672 = vld [vmem:[%s3 + $0x2c] sm:$0xf]
    %v673 = vld [vmem:[%s3 + $0x30] sm:$0xf]
    %v674 = vld [vmem:[%s3 + $0x34] sm:$0xf]
    %v675 = vld [vmem:[%s3 + $0x38] sm:$0xf]
    %v676 = vld [vmem:[%s3 + $0x3c] sm:$0xf]
    %v677 = vld [vmem:[%s4] sm:$0x1]
    %v679 = vlaneseq
    %v680 = vshrl.u32 %v679, 7
    %v681 = vsub.s32 0, %v680
    %v682 = vrot.slane %v677, %v681
    %v700 = vunpack.c.l.b16 %v661
    %v701 = vunpack.c.l.b16 %v662
    %v702 = vunpack.c.l.b16 %v663
    %v703 = vunpack.c.l.b16 %v664
    %v704 = vunpack.c.l.b16 %v665
    %v705 = vunpack.c.l.b16 %v666
    %v706 = vunpack.c.l.b16 %v667
    %v707 = vunpack.c.l.b16 %v668
    %v708 = vunpack.c.l.b16 %v669
    %v709 = vunpack.c.l.b16 %v670
    %v710 = vunpack.c.l.b16 %v671
    %v711 = vunpack.c.l.b16 %v672
    %v712 = vunpack.c.l.b16 %v673
    %v713 = vunpack.c.l.b16 %v674
    %v714 = vunpack.c.l.b16 %v675
    %v715 = vunpack.c.l.b16 %v676
    %v716 = vpack.c.b16 %v701, %v700
    %v717 = vpack.c.b16 %v703, %v702
    %v718 = vpack.c.b16 %v705, %v704
    %v719 = vpack.c.b16 %v707, %v706
    %v720 = vpack.c.b16 %v709, %v708
    %v721 = vpack.c.b16 %v711, %v710
    %v722 = vpack.c.b16 %v713, %v712
    %v723 = vpack.c.b16 %v715, %v714
    %732 = vmatprep.subr.bf16.mxu0 0
    %733 = vmatpush1.bf16.msra.mxu0 %v723
    %734 = vmatprep.subr.bf16.mxu0 0
    %735 = vmatpush1.bf16.msra.mxu0 %v722
    %736 = vmatprep.subr.bf16.mxu0 0
    %737 = vmatpush1.bf16.msra.mxu0 %v721
    %738 = vmatprep.subr.bf16.mxu0 0
    %739 = vmatpush1.bf16.msra.mxu0 %v720
    %740 = vmatprep.subr.bf16.mxu0 0
    %741 = vmatpush1.bf16.msra.mxu0 %v719
    %742 = vmatprep.subr.bf16.mxu0 0
    %743 = vmatpush1.bf16.msra.mxu0 %v718
    %744 = vmatprep.subr.bf16.mxu0 0
    %745 = vmatpush1.bf16.msra.mxu0 %v717
    %746 = vmatprep.subr.bf16.mxu0 0
    %747 = vmatpush1.bf16.msra.mxu0 %v716
    %748 = vmatprep.subr.bf16.mxu0 0
    %749 = vmatpush2.bf16.msra.mxu0 0
    %750 = vmatprep.subr.bf16.mxu0 0
    %751 = vmatpush2.bf16.msra.mxu0 0
    %752 = vmatprep.subr.bf16.mxu0 0
    %753 = vmatpush2.bf16.msra.mxu0 0
    %754 = vmatprep.subr.bf16.mxu0 0
    %755 = vmatpush2.bf16.msra.mxu0 0
    %756 = vmatprep.subr.bf16.mxu0 0
    %757 = vmatpush2.bf16.msra.mxu0 0
    %758 = vmatprep.subr.bf16.mxu0 0
    %759 = vmatpush2.bf16.msra.mxu0 0
    %760 = vmatprep.subr.bf16.mxu0 0
    %761 = vmatpush2.bf16.msra.mxu0 0
    %762 = vmatprep.subr.bf16.mxu0 0
    %763 = vmatpush2.bf16.msra.mxu0 0
    %764 = vmatprep.mubr.bf16.mxu0 0
    %765 = vmatmul.mubr.bf16.gmra.mxu0 %v660
    %v766 = vpop.f32.mrf.mxu0
    %v767 = vadd.f32 %v682, %v766
    %v768 = vpop.f32.mrf.mxu0
    %v769 = vpop.f32.mrf.mxu0
    %v770 = vadd.f32 %v682, %v769
    %v771 = vpop.f32.mrf.mxu0
    %772 = vdwg.mxu0
    %vm773 = vcmask 80896
    %774 = vst.msk [vmem:[#allocation5] sm:$0xff] %vm773, %v767
    %775 = vst.msk [vmem:[#allocation5 + $0x8] sm:$0xff] %vm773, %v770
    // Predicated region
    $region26: #{tpu_custom_call.1} parent=1 // pred_check
      _
    $region27: #{tpu_custom_call.1} parent=1 // pred_check_branch
      %777 = sbr.rel (0) target = $region29
    $region28: #{tpu_custom_call.1} parent=1 // pred_region
      %s779 = ssub.s32 256, 256
      %780 = vsyncadd [#allocation4], %s779
      %s781 = sshll.u32 [#allocation5], 4
      %s782 = int_to_ptr.vmem [resolvable:$true] %s781
      %787 = dma.vmem_to_hbm [thread:$0]  %s782, 256, %s5, [#allocation4], 128, 128, 8
    $region29: #{tpu_custom_call.1} parent=1 // pred_fallthru
      _
    // Predicated region
    $region30: #{tpu_custom_call.1} parent=1 // pred_check
      _
    $region31: #{tpu_custom_call.1} parent=1 // pred_check_branch
      %789 = sbr.rel (0) target = $region33
    $region32: #{tpu_custom_call.1} parent=1 // pred_region
      %790 = dma.done [#allocation4], 256
    $region33: #{tpu_custom_call.1} parent=1 // pred_fallthru
      _
    %791 = vsyncpa [#allocation3], 1
    %792 = vsyncpa [#allocation4], 1

</llo_original>
